<compile_context>
chip_gen: v7x
topology: tpu7x:2x2x1
jax: 0.10.0
libtpu: 0.0.40
codegen_flags: <defaults>
</compile_context>

<pallas_src>
import functools

import jax
import jax.numpy as jnp
from jax import lax
from jax.experimental import pallas as pl
from jax.experimental.pallas import tpu as pltpu

_LANE = 128
_SUBLANE = 8


def _round_up(x, m):
    return ((x + m - 1) // m) * m


def _cdiv(a, b):
    return -(-a // b)


def _num_parallel_tensorcores():
    """2 for v7x (two TensorCores share the grid via megacore), else 1."""
    try:
        kind = jax.devices()[0].device_kind.lower()
        if "7" in kind:
            return 2
    except Exception:
        pass
    return 1


def _choose_tile_b(batch, max_tile, n_cores):
    """Pick a lane-dense batch tile (multiple of 128).

    v5e / v6e (1 TC): single biggest tile, no forced split (a split is pure
    per-step overhead on a serial grid).  v7x (2 TCs): keep the step count even
    so neither core idles on a tail step."""
    b128 = _round_up(max(batch, 1), _LANE)
    max_tile = max(_LANE, (max_tile // _LANE) * _LANE)
    tile = min(max_tile, b128)
    steps = _cdiv(b128, tile)
    if n_cores >= 2 and b128 >= 2 * _LANE and steps % 2 == 1:
        steps_even = steps + 1
        tile = max(_LANE, _round_up(_cdiv(b128, steps_even), _LANE))
        steps = _cdiv(b128, tile)
    b_pad = steps * tile
    return tile, b_pad


def _make_kernel(out_pads, bias_offs, n_layers):
    """Fused 6-layer MLP.  Inputs: x (tile_b, in_dim) f32, six bf16 weight
    matrices in (out, in) layout, one packed f32 bias slab (sum_out, 1)."""

    def kernel(x_ref, *rest):
        w_refs = rest[:n_layers]
        b_ref = rest[n_layers]
        o_ref = rest[n_layers + 1]

        # Cast inside the kernel: the DMA reads f32 x straight from HBM, no
        # extra wrapper-side convert/transpose pass.
        h = x_ref[...].astype(jnp.bfloat16)                 # (tile_b, in_dim)

        # Layer 1: contract both operands on their last dim so the result is
        # already lane-dense (out, tile_b) — no explicit transpose needed.
        y = lax.dot_general(
            w_refs[0][...], h,
            dimension_numbers=(((1,), (1,)), ((), ())),
            preferred_element_type=jnp.float32)             # (out1, tile_b) f32
        y = y + b_ref[pl.ds(bias_offs[0], out_pads[0]), :]  # bias: f32, lane-broadcast
        y = jnp.maximum(y, 0.0)
        h = y.astype(jnp.bfloat16)

        # Remaining layers: activations are already (features, tile_b).
        # Dropout(0.2) after layer 3's ReLU is identity in eval mode.
        # TODO(synk): training-mode dropout (PRNG mask + 1/0.8 scale) not emitted.
        for li in range(1, n_layers):
            y = jnp.dot(w_refs[li][...], h,
                        preferred_element_type=jnp.float32)
            y = y + b_ref[pl.ds(bias_offs[li], out_pads[li]), :]
            if li < n_layers - 1:
                y = jnp.maximum(y, 0.0)
                h = y.astype(jnp.bfloat16)
            else:
                h = y                                        # final Linear stays f32
        o_ref[...] = h

    return kernel


def _forward_impl(x, params, *, max_tile_b=2048):
    """x: (B, input_dim) f32.  params: list of (W, b), W in PyTorch
    (out_features, in_features) layout.  Returns (B, output_dim) f32."""
    B, in_dim = x.shape
    n_layers = len(params)

    outs = [int(W.shape[0]) for W, _ in params]
    out_pads = [_round_up(o, _SUBLANE) for o in outs]        # align sublanes
    in_pads = [in_dim] + out_pads[:-1]

    # Zero-pad weights to aligned (out_pad, in_pad), cast to bf16 (MXU operand
    # dtype); pack all biases into one f32 slab (fewer pipelined inputs).
    Ws, b_chunks, bias_offs = [], [], []
    off = 0
    for li, (W, b) in enumerate(params):
        op, ip = out_pads[li], in_pads[li]
        Wp = jnp.zeros((op, ip), jnp.bfloat16)
        Wp = Wp.at[:W.shape[0], :W.shape[1]].set(W.astype(jnp.bfloat16))
        Ws.append(Wp)
        bp = jnp.zeros((op,), jnp.float32).at[:b.shape[0]].set(
            b.astype(jnp.float32))
        b_chunks.append(bp)
        bias_offs.append(off)
        off += op
    bpack = jnp.concatenate(b_chunks).reshape(-1, 1)         # (sum_out_pad, 1)

    n_cores = _num_parallel_tensorcores()
    tile_b, b_pad = _choose_tile_b(B, max_tile_b, n_cores)

    # Only the batch axis is padded (and only when needed); no transpose/cast
    # of x in the wrapper.
    if b_pad != B:
        x = jnp.pad(x, ((0, b_pad - B), (0, 0)))

    in_specs = [pl.BlockSpec((tile_b, in_dim), lambda i: (i, 0))]
    for Wp in Ws:
        in_specs.append(pl.BlockSpec(Wp.shape, lambda i: (0, 0)))   # resident
    in_specs.append(pl.BlockSpec(bpack.shape, lambda i: (0, 0)))    # resident

    out_spec = pl.BlockSpec((out_pads[-1], tile_b), lambda i: (0, i))

    kernel = _make_kernel(tuple(out_pads), tuple(bias_offs), n_layers)

    oT = pl.pallas_call(
        kernel,
        out_shape=jax.ShapeDtypeStruct((out_pads[-1], b_pad), jnp.float32),
        grid_spec=pltpu.PrefetchScalarGridSpec(
            num_scalar_prefetch=0,
            grid=(b_pad // tile_b,),
            in_specs=in_specs,
            out_specs=out_spec,
        ),
        compiler_params=pltpu.CompilerParams(
            dimension_semantics=("parallel",)),
    )(x, *Ws, bpack)

    # Strip batch / feature padding; caller gets PyTorch-shaped (B, out_dim).
    return jnp.transpose(oT[:outs[-1], :B])


# One jit over pad + pallas_call + slice/transpose: no per-op dispatch or extra
# HBM round trips in the wrapper.
model_regv3_forward = jax.jit(_forward_impl, static_argnames=("max_tile_b",))


def init_params(key, input_dim, output_dim):
    """PyTorch nn.Linear-style init; weights stored (out_features, in_features)."""
    dims = [
        input_dim,
        input_dim * 3,
        input_dim * 2,
        input_dim + 32,
        input_dim // 2 + 16,
        input_dim // 4 + 8,
        output_dim,
    ]
    params = []
    for i in range(len(dims) - 1):
        fan_in, fan_out = dims[i], dims[i + 1]
        key, kw, kb = jax.random.split(key, 3)
        bound = 1.0 / (fan_in ** 0.5)   # PyTorch default uniform(-1/sqrt(fan_in), +)
        W = jax.random.uniform(kw, (fan_out, fan_in), jnp.float32, -bound, bound)
        b = jax.random.uniform(kb, (fan_out,), jnp.float32, -bound, bound)
        params.append((W, b))
    return params


def reference_forward(x, params):
    """Pure f32 reference matching the PyTorch module (eval mode)."""
    h = x
    n = len(params)
    for i, (W, b) in enumerate(params):
        h = h @ W.T + b
        if i < n - 1:
            h = jnp.maximum(h, 0.0)
    return h


if __name__ == "__main__":
    input_dim = 32
    output_dim = 8
    batch = 16   # small demo batch; kernel rounds it up to one 128-lane tile

    key = jax.random.PRNGKey(0)
    kx, kp = jax.random.split(key)
    x = jax.random.normal(kx, (batch, input_dim), jnp.float32)
    params = init_params(kp, input_dim, output_dim)

    out = model_regv3_forward(x, params)
    out = jax.block_until_ready(out)

    ref = reference_forward(x, params)
    assert out.shape == (batch, output_dim)
    # bf16 matmul operands (f32 accumulation) -> looser tolerance than pure f32.
    assert jnp.allclose(out, ref, atol=5e-2, rtol=5e-2), "mismatch vs reference"

    print("KERNEL_OK")
</pallas_src>

<mosaic_0001>
module attributes {stable_mosaic.version = 11 : i64} {
  func.func @kernel(%arg0: i32, %arg1: memref<128x32xf32, #tpu.memory_space<vmem>>, %arg2: memref<96x32xbf16, #tpu.memory_space<vmem>>, %arg3: memref<64x96xbf16, #tpu.memory_space<vmem>>, %arg4: memref<64x64xbf16, #tpu.memory_space<vmem>>, %arg5: memref<32x64xbf16, #tpu.memory_space<vmem>>, %arg6: memref<16x32xbf16, #tpu.memory_space<vmem>>, %arg7: memref<8x16xbf16, #tpu.memory_space<vmem>>, %arg8: memref<280x1xf32, #tpu.memory_space<vmem>>, %arg9: memref<8x128xf32, #tpu.memory_space<vmem>>) attributes {dimension_semantics = [#tpu.dimension_semantics<parallel>], iteration_bounds = array<i64: 1>, scalar_prefetch = 0 : i64, scratch_operands = 0 : i64, tpu.core_type = #tpu.core_type<tc>, window_params = [{transform_indices = @transform_0, window_bounds = array<i64: 128, 32>}, {pipeline_mode = #tpu.pipeline_mode<synchronous>, transform_indices = @transform_1, window_bounds = array<i64: 96, 32>}, {pipeline_mode = #tpu.pipeline_mode<synchronous>, transform_indices = @transform_2, window_bounds = array<i64: 64, 96>}, {pipeline_mode = #tpu.pipeline_mode<synchronous>, transform_indices = @transform_3, window_bounds = array<i64: 64, 64>}, {pipeline_mode = #tpu.pipeline_mode<synchronous>, transform_indices = @transform_4, window_bounds = array<i64: 32, 64>}, {pipeline_mode = #tpu.pipeline_mode<synchronous>, transform_indices = @transform_5, window_bounds = array<i64: 16, 32>}, {pipeline_mode = #tpu.pipeline_mode<synchronous>, transform_indices = @transform_6, window_bounds = array<i64: 8, 16>}, {pipeline_mode = #tpu.pipeline_mode<synchronous>, transform_indices = @transform_7, window_bounds = array<i64: 280, 1>}, {transform_indices = @transform_8, window_bounds = array<i64: 8, 128>}]} {
    %c0 = arith.constant 0 : index
    %c0_0 = arith.constant 0 : index
    %0 = vector.load %arg1[%c0, %c0_0] : memref<128x32xf32, #tpu.memory_space<vmem>>, vector<128x32xf32>
    %1 = arith.truncf %0 : vector<128x32xf32> to vector<128x32xbf16>
    %c0_1 = arith.constant 0 : index
    %c0_2 = arith.constant 0 : index
    %2 = vector.load %arg2[%c0_1, %c0_2] : memref<96x32xbf16, #tpu.memory_space<vmem>>, vector<96x32xbf16>
    %cst = arith.constant dense<0.000000e+00> : vector<96x128xf32>
    %3 = tpu.matmul %2, %1, %cst {dimension_numbers = #tpu.dot_dimension_numbers<[1], [1], [0], [0], [0, 0, 1, 0], [], []>} : vector<96x32xbf16>, vector<128x32xbf16>, vector<96x128xf32> -> vector<96x128xf32>
    %c0_3 = arith.constant 0 : index
    %c0_4 = arith.constant 0 : index
    %4 = vector.load %arg8[%c0_3, %c0_4] : memref<280x1xf32, #tpu.memory_space<vmem>>, vector<96x1xf32>
    %5 = vector.broadcast %4 : vector<96x1xf32> to vector<96x128xf32>
    %6 = arith.addf %3, %5 : vector<96x128xf32>
    %cst_5 = arith.constant 0.000000e+00 : f32
    %7 = vector.broadcast %cst_5 : f32 to vector<96x128xf32>
    %8 = arith.maximumf %6, %7 : vector<96x128xf32>
    %9 = arith.truncf %8 : vector<96x128xf32> to vector<96x128xbf16>
    %c0_6 = arith.constant 0 : index
    %c0_7 = arith.constant 0 : index
    %10 = vector.load %arg3[%c0_6, %c0_7] : memref<64x96xbf16, #tpu.memory_space<vmem>>, vector<64x96xbf16>
    %cst_8 = arith.constant dense<0.000000e+00> : vector<64x128xf32>
    %11 = tpu.matmul %10, %9, %cst_8 {dimension_numbers = #tpu.dot_dimension_numbers<[1], [0], [0], [1], [0, 0, 1, 1], [], []>} : vector<64x96xbf16>, vector<96x128xbf16>, vector<64x128xf32> -> vector<64x128xf32>
    %c96 = arith.constant 96 : index
    %c0_9 = arith.constant 0 : index
    %12 = vector.load %arg8[%c96, %c0_9] : memref<280x1xf32, #tpu.memory_space<vmem>>, vector<64x1xf32>
    %13 = vector.broadcast %12 : vector<64x1xf32> to vector<64x128xf32>
    %14 = arith.addf %11, %13 : vector<64x128xf32>
    %cst_10 = arith.constant 0.000000e+00 : f32
    %15 = vector.broadcast %cst_10 : f32 to vector<64x128xf32>
    %16 = arith.maximumf %14, %15 : vector<64x128xf32>
    %17 = arith.truncf %16 : vector<64x128xf32> to vector<64x128xbf16>
    %c0_11 = arith.constant 0 : index
    %c0_12 = arith.constant 0 : index
    %18 = vector.load %arg4[%c0_11, %c0_12] : memref<64x64xbf16, #tpu.memory_space<vmem>>, vector<64x64xbf16>
    %cst_13 = arith.constant dense<0.000000e+00> : vector<64x128xf32>
    %19 = tpu.matmul %18, %17, %cst_13 {dimension_numbers = #tpu.dot_dimension_numbers<[1], [0], [0], [1], [0, 0, 1, 1], [], []>} : vector<64x64xbf16>, vector<64x128xbf16>, vector<64x128xf32> -> vector<64x128xf32>
    %c160 = arith.constant 160 : index
    %c0_14 = arith.constant 0 : index
    %20 = vector.load %arg8[%c160, %c0_14] : memref<280x1xf32, #tpu.memory_space<vmem>>, vector<64x1xf32>
    %21 = vector.broadcast %20 : vector<64x1xf32> to vector<64x128xf32>
    %22 = arith.addf %19, %21 : vector<64x128xf32>
    %cst_15 = arith.constant 0.000000e+00 : f32
    %23 = vector.broadcast %cst_15 : f32 to vector<64x128xf32>
    %24 = arith.maximumf %22, %23 : vector<64x128xf32>
    %25 = arith.truncf %24 : vector<64x128xf32> to vector<64x128xbf16>
    %c0_16 = arith.constant 0 : index
    %c0_17 = arith.constant 0 : index
    %26 = vector.load %arg5[%c0_16, %c0_17] : memref<32x64xbf16, #tpu.memory_space<vmem>>, vector<32x64xbf16>
    %cst_18 = arith.constant dense<0.000000e+00> : vector<32x128xf32>
    %27 = tpu.matmul %26, %25, %cst_18 {dimension_numbers = #tpu.dot_dimension_numbers<[1], [0], [0], [1], [0, 0, 1, 1], [], []>} : vector<32x64xbf16>, vector<64x128xbf16>, vector<32x128xf32> -> vector<32x128xf32>
    %c224 = arith.constant 224 : index
    %c0_19 = arith.constant 0 : index
    %28 = vector.load %arg8[%c224, %c0_19] : memref<280x1xf32, #tpu.memory_space<vmem>>, vector<32x1xf32>
    %29 = vector.broadcast %28 : vector<32x1xf32> to vector<32x128xf32>
    %30 = arith.addf %27, %29 : vector<32x128xf32>
    %cst_20 = arith.constant 0.000000e+00 : f32
    %31 = vector.broadcast %cst_20 : f32 to vector<32x128xf32>
    %32 = arith.maximumf %30, %31 : vector<32x128xf32>
    %33 = arith.truncf %32 : vector<32x128xf32> to vector<32x128xbf16>
    %c0_21 = arith.constant 0 : index
    %c0_22 = arith.constant 0 : index
    %34 = vector.load %arg6[%c0_21, %c0_22] : memref<16x32xbf16, #tpu.memory_space<vmem>>, vector<16x32xbf16>
    %cst_23 = arith.constant dense<0.000000e+00> : vector<16x128xf32>
    %35 = tpu.matmul %34, %33, %cst_23 {dimension_numbers = #tpu.dot_dimension_numbers<[1], [0], [0], [1], [0, 0, 1, 1], [], []>} : vector<16x32xbf16>, vector<32x128xbf16>, vector<16x128xf32> -> vector<16x128xf32>
    %c256 = arith.constant 256 : index
    %c0_24 = arith.constant 0 : index
    %36 = vector.load %arg8[%c256, %c0_24] : memref<280x1xf32, #tpu.memory_space<vmem>>, vector<16x1xf32>
    %37 = vector.broadcast %36 : vector<16x1xf32> to vector<16x128xf32>
    %38 = arith.addf %35, %37 : vector<16x128xf32>
    %cst_25 = arith.constant 0.000000e+00 : f32
    %39 = vector.broadcast %cst_25 : f32 to vector<16x128xf32>
    %40 = arith.maximumf %38, %39 : vector<16x128xf32>
    %41 = arith.truncf %40 : vector<16x128xf32> to vector<16x128xbf16>
    %c0_26 = arith.constant 0 : index
    %c0_27 = arith.constant 0 : index
    %42 = vector.load %arg7[%c0_26, %c0_27] : memref<8x16xbf16, #tpu.memory_space<vmem>>, vector<8x16xbf16>
    %cst_28 = arith.constant dense<0.000000e+00> : vector<8x128xf32>
    %43 = tpu.matmul %42, %41, %cst_28 {dimension_numbers = #tpu.dot_dimension_numbers<[1], [0], [0], [1], [0, 0, 1, 1], [], []>} : vector<8x16xbf16>, vector<16x128xbf16>, vector<8x128xf32> -> vector<8x128xf32>
    %c272 = arith.constant 272 : index
    %c0_29 = arith.constant 0 : index
    %44 = vector.load %arg8[%c272, %c0_29] : memref<280x1xf32, #tpu.memory_space<vmem>>, vector<8x1xf32>
    %45 = vector.broadcast %44 : vector<8x1xf32> to vector<8x128xf32>
    %46 = arith.addf %43, %45 : vector<8x128xf32>
    %c0_30 = arith.constant 0 : index
    %c0_31 = arith.constant 0 : index
    %47 = vector.load %arg9[%c0_30, %c0_31] : memref<8x128xf32, #tpu.memory_space<vmem>>, vector<8x128xf32>
    tpu.vector_store %arg9[%c0_30, %c0_31], %46 {strides = array<i32>} : memref<8x128xf32, #tpu.memory_space<vmem>>, vector<8x128xf32>,
    return
  }
  func.func @transform_0(%arg0: i32) -> (i32, i32) {
    %c0_i32 = arith.constant 0 : i32
    %c0_i32_0 = arith.constant 0 : i32
    return %arg0, %c0_i32 : i32, i32
  }
  func.func @transform_1(%arg0: i32) -> (i32, i32) {
    %c0_i32 = arith.constant 0 : i32
    %c0_i32_0 = arith.constant 0 : i32
    %c0_i32_1 = arith.constant 0 : i32
    return %c0_i32, %c0_i32_0 : i32, i32
  }
  func.func @transform_2(%arg0: i32) -> (i32, i32) {
    %c0_i32 = arith.constant 0 : i32
    %c0_i32_0 = arith.constant 0 : i32
    %c0_i32_1 = arith.constant 0 : i32
    return %c0_i32, %c0_i32_0 : i32, i32
  }
  func.func @transform_3(%arg0: i32) -> (i32, i32) {
    %c0_i32 = arith.constant 0 : i32
    %c0_i32_0 = arith.constant 0 : i32
    %c0_i32_1 = arith.constant 0 : i32
    return %c0_i32, %c0_i32_0 : i32, i32
  }
  func.func @transform_4(%arg0: i32) -> (i32, i32) {
    %c0_i32 = arith.constant 0 : i32
    %c0_i32_0 = arith.constant 0 : i32
    %c0_i32_1 = arith.constant 0 : i32
    return %c0_i32, %c0_i32_0 : i32, i32
  }
  func.func @transform_5(%arg0: i32) -> (i32, i32) {
    %c0_i32 = arith.constant 0 : i32
    %c0_i32_0 = arith.constant 0 : i32
    %c0_i32_1 = arith.constant 0 : i32
    return %c0_i32, %c0_i32_0 : i32, i32
  }
  func.func @transform_6(%arg0: i32) -> (i32, i32) {
    %c0_i32 = arith.constant 0 : i32
    %c0_i32_0 = arith.constant 0 : i32
    %c0_i32_1 = arith.constant 0 : i32
    return %c0_i32, %c0_i32_0 : i32, i32
  }
  func.func @transform_7(%arg0: i32) -> (i32, i32) {
    %c0_i32 = arith.constant 0 : i32
    %c0_i32_0 = arith.constant 0 : i32
    %c0_i32_1 = arith.constant 0 : i32
    return %c0_i32, %c0_i32_0 : i32, i32
  }
  func.func @transform_8(%arg0: i32) -> (i32, i32) {
    %c0_i32 = arith.constant 0 : i32
    %c0_i32_0 = arith.constant 0 : i32
    return %c0_i32, %arg0 : i32, i32
  }
}

</mosaic_0001>

<llo_original>
// kernel: _forward_impl.1
$region0: #{_forward_impl.1}
  #allocation0 [shape = 'u32[]', space=smem, size = 0x4, offset = 0x4, fixed_abs, tag = 'smem constant byte address 0x4 - core index']
  #allocation1 [shape = 'u32[144,128]{1,0:T(1,128)}', space=vmem, size = 0x12000, scoped, tag = 'internal scratch']
  %s0 = inlined_call_operand.vmem [shape: f32[128,32], index: 0, kind: input, shape index: {}]
  %s1 = inlined_call_operand.vmem [shape: bf16[96,32], index: 1, kind: input, shape index: {}]
  %s2 = inlined_call_operand.vmem [shape: bf16[64,96], index: 2, kind: input, shape index: {}]
  %s3 = inlined_call_operand.vmem [shape: bf16[64,64], index: 3, kind: input, shape index: {}]
  %s4 = inlined_call_operand.vmem [shape: bf16[32,64], index: 4, kind: input, shape index: {}]
  %s5 = inlined_call_operand.vmem [shape: bf16[16,32], index: 5, kind: input, shape index: {}]
  %s6 = inlined_call_operand.vmem [shape: bf16[8,16], index: 6, kind: input, shape index: {}]
  %s7 = inlined_call_operand.vmem [shape: f32[280,1], index: 7, kind: input, shape index: {}]
  %s8 = inlined_call_operand.vmem [shape: f32[8,128], index: 8, kind: output, shape index: {}]
  %s9 = sld [smem:[#allocation0]]
  $region42: #{_forward_impl.1} parent=0
    _
  %s11 = ssub.s32 1, %s9
  %s12 = scalar_select 0, %s11, %s9
  // Predicated region
  $region2: #{_forward_impl.1} parent=0 // pred_check
    _
  $region3: #{_forward_impl.1} parent=0 // pred_check_branch
    %14 = sbr.rel (0) target = $region5
  $region4: #{_forward_impl.1} parent=0 // pred_region
    _
  $region5: #{_forward_impl.1} parent=0 // pred_fallthru
    _
  // Predicated region
  $region6: #{_forward_impl.1} parent=0 // pred_check
    _
  $region7: #{_forward_impl.1} parent=0 // pred_check_branch
    %16 = sbr.rel (0) target = $region9
  $region8: #{_forward_impl.1} parent=0 // pred_region
    _
  $region9: #{_forward_impl.1} parent=0 // pred_fallthru
    _
  // Predicated region
  $region10: #{_forward_impl.1} parent=0 // pred_check
    _
  $region11: #{_forward_impl.1} parent=0 // pred_check_branch
    %18 = sbr.rel (0) target = $region13
  $region12: #{_forward_impl.1} parent=0 // pred_region
    _
  $region13: #{_forward_impl.1} parent=0 // pred_fallthru
    _
  // Predicated region
  $region14: #{_forward_impl.1} parent=0 // pred_check
    _
  $region15: #{_forward_impl.1} parent=0 // pred_check_branch
    %20 = sbr.rel (0) target = $region17
  $region16: #{_forward_impl.1} parent=0 // pred_region
    _
  $region17: #{_forward_impl.1} parent=0 // pred_fallthru
    _
  // Predicated region
  $region18: #{_forward_impl.1} parent=0 // pred_check
    _
  $region19: #{_forward_impl.1} parent=0 // pred_check_branch
    %22 = sbr.rel (0) target = $region21
  $region20: #{_forward_impl.1} parent=0 // pred_region
    _
  $region21: #{_forward_impl.1} parent=0 // pred_fallthru
    _
  // Predicated region
  $region22: #{_forward_impl.1} parent=0 // pred_check
    _
  $region23: #{_forward_impl.1} parent=0 // pred_check_branch
    %24 = sbr.rel (0) target = $region25
  $region24: #{_forward_impl.1} parent=0 // pred_region
    _
  $region25: #{_forward_impl.1} parent=0 // pred_fallthru
    _
  // Predicated region
  $region26: #{_forward_impl.1} parent=0 // pred_check
    _
  $region27: #{_forward_impl.1} parent=0 // pred_check_branch
    %26 = sbr.rel (0) target = $region29
  $region28: #{_forward_impl.1} parent=0 // pred_region
    _
  $region29: #{_forward_impl.1} parent=0 // pred_fallthru
    _
  // Predicated region
  $region30: #{_forward_impl.1} parent=0 // pred_check
    _
  $region31: #{_forward_impl.1} parent=0 // pred_check_branch
    %28 = sbr.rel (0) target = $region33
  $region32: #{_forward_impl.1} parent=0 // pred_region
    _
  $region33: #{_forward_impl.1} parent=0 // pred_fallthru
    _
  %v30 = vld [vmem:[%s0] sm:$0xff]
  %v31 = vld [vmem:[%s0 + $0x8] sm:$0xff]
  %v32 = vld [vmem:[%s0 + $0x10] sm:$0xff]
  %v33 = vld [vmem:[%s0 + $0x18] sm:$0xff]
  %v34 = vld [vmem:[%s0 + $0x20] sm:$0xff]
  %v35 = vld [vmem:[%s0 + $0x28] sm:$0xff]
  %v36 = vld [vmem:[%s0 + $0x30] sm:$0xff]
  %v37 = vld [vmem:[%s0 + $0x38] sm:$0xff]
  %v38 = vld [vmem:[%s0 + $0x40] sm:$0xff]
  %v39 = vld [vmem:[%s0 + $0x48] sm:$0xff]
  %v40 = vld [vmem:[%s0 + $0x50] sm:$0xff]
  %v41 = vld [vmem:[%s0 + $0x58] sm:$0xff]
  %v42 = vld [vmem:[%s0 + $0x60] sm:$0xff]
  %v43 = vld [vmem:[%s0 + $0x68] sm:$0xff]
  %v44 = vld [vmem:[%s0 + $0x70] sm:$0xff]
  %v45 = vld [vmem:[%s0 + $0x78] sm:$0xff]
  %v46 = vpack.c.bf16 %v31, %v30
  %v47 = vpack.c.bf16 %v33, %v32
  %v48 = vpack.c.bf16 %v35, %v34
  %v49 = vpack.c.bf16 %v37, %v36
  %v50 = vpack.c.bf16 %v39, %v38
  %v51 = vpack.c.bf16 %v41, %v40
  %v52 = vpack.c.bf16 %v43, %v42
  %v53 = vpack.c.bf16 %v45, %v44
  %v54 = vld [vmem:[%s1] sm:$0xf]
  %v55 = vld [vmem:[%s1 + $0x4] sm:$0xf]
  %v56 = vld [vmem:[%s1 + $0x8] sm:$0xf]
  %v57 = vld [vmem:[%s1 + $0xc] sm:$0xf]
  %v58 = vld [vmem:[%s1 + $0x10] sm:$0xf]
  %v59 = vld [vmem:[%s1 + $0x14] sm:$0xf]
  %v60 = vld [vmem:[%s1 + $0x18] sm:$0xf]
  %v61 = vld [vmem:[%s1 + $0x1c] sm:$0xf]
  %v62 = vld [vmem:[%s1 + $0x20] sm:$0xf]
  %v63 = vld [vmem:[%s1 + $0x24] sm:$0xf]
  %v64 = vld [vmem:[%s1 + $0x28] sm:$0xf]
  %v65 = vld [vmem:[%s1 + $0x2c] sm:$0xf]
  %v66 = vld [vmem:[%s7] sm:$0xff]
  %v67 = vld [vmem:[%s7 + $0x8] sm:$0xff]
  %v68 = vld [vmem:[%s7 + $0x10] sm:$0xff]
  %v69 = vld [vmem:[%s7 + $0x18] sm:$0xff]
  %v70 = vld [vmem:[%s7 + $0x20] sm:$0xff]
  %v71 = vld [vmem:[%s7 + $0x28] sm:$0xff]
  %v72 = vld [vmem:[%s7 + $0x30] sm:$0xff]
  %v73 = vld [vmem:[%s7 + $0x38] sm:$0xff]
  %v74 = vld [vmem:[%s7 + $0x40] sm:$0xff]
  %v75 = vld [vmem:[%s7 + $0x48] sm:$0xff]
  %v76 = vld [vmem:[%s7 + $0x50] sm:$0xff]
  %v77 = vld [vmem:[%s7 + $0x58] sm:$0xff]
  %79 = vset.pattern.permute.xlu0 0
  %80 = vperm.xlu0 %79, %v66
  %v81 = vpop.permute.xlu0 %80
  %84 = vset.pattern.permute.xlu0 0
  %85 = vperm.xlu0 %84, %v67
  %v86 = vpop.permute.xlu0 %85
  %89 = vset.pattern.permute.xlu0 0
  %90 = vperm.xlu0 %89, %v68
  %v91 = vpop.permute.xlu0 %90
  %94 = vset.pattern.permute.xlu0 0
  %95 = vperm.xlu0 %94, %v69
  %v96 = vpop.permute.xlu0 %95
  %99 = vset.pattern.permute.xlu0 0
  %100 = vperm.xlu0 %99, %v70
  %v101 = vpop.permute.xlu0 %100
  %104 = vset.pattern.permute.xlu0 0
  %105 = vperm.xlu0 %104, %v71
  %v106 = vpop.permute.xlu0 %105
  %109 = vset.pattern.permute.xlu0 0
  %110 = vperm.xlu0 %109, %v72
  %v111 = vpop.permute.xlu0 %110
  %114 = vset.pattern.permute.xlu0 0
  %115 = vperm.xlu0 %114, %v73
  %v116 = vpop.permute.xlu0 %115
  %119 = vset.pattern.permute.xlu0 0
  %120 = vperm.xlu0 %119, %v74
  %v121 = vpop.permute.xlu0 %120
  %124 = vset.pattern.permute.xlu0 0
  %125 = vperm.xlu0 %124, %v75
  %v126 = vpop.permute.xlu0 %125
  %129 = vset.pattern.permute.xlu0 0
  %130 = vperm.xlu0 %129, %v76
  %v131 = vpop.permute.xlu0 %130
  %134 = vset.pattern.permute.xlu0 0
  %135 = vperm.xlu0 %134, %v77
  %v136 = vpop.permute.xlu0 %135
  %v150 = vunpack.c.l.b16 %v54
  %v151 = vunpack.c.l.b16 %v55
  %v152 = vunpack.c.l.b16 %v56
  %v153 = vunpack.c.l.b16 %v57
  %v154 = vunpack.c.l.b16 %v58
  %v155 = vunpack.c.l.b16 %v59
  %v156 = vunpack.c.l.b16 %v60
  %v157 = vunpack.c.l.b16 %v61
  %v158 = vunpack.c.l.b16 %v62
  %v159 = vunpack.c.l.b16 %v63
  %v160 = vunpack.c.l.b16 %v64
  %v161 = vunpack.c.l.b16 %v65
  %v162 = vpack.c.b16 %v151, %v150
  %v163 = vpack.c.b16 %v153, %v152
  %v164 = vpack.c.b16 %v155, %v154
  %v165 = vpack.c.b16 %v157, %v156
  %v166 = vpack.c.b16 %v159, %v158
  %v167 = vpack.c.b16 %v161, %v160
  %vm168 = vcmask 261120
  %v170 = vsel %vm168, %v162, 0
  %v173 = vsel %vm168, %v163, 0
  %v176 = vsel %vm168, %v164, 0
  %v179 = vsel %vm168, %v165, 0
  %v182 = vsel %vm168, %v166, 0
  %v185 = vsel %vm168, %v167, 0
  %v188 = vsel %vm168, %v46, 0
  %v191 = vsel %vm168, %v47, 0
  %v194 = vsel %vm168, %v48, 0
  %v197 = vsel %vm168, %v49, 0
  %v200 = vsel %vm168, %v50, 0
  %v203 = vsel %vm168, %v51, 0
  %v206 = vsel %vm168, %v52, 0
  %v209 = vsel %vm168, %v53, 0
  %211 = vmatprep.subr.bf16.mxu0 0
  %212 = vmatpush1.bf16.xpose.msra.mxu0 %v188
  %213 = vmatprep.subr.bf16.mxu0 0
  %214 = vmatpush1.bf16.xpose.msra.mxu0 %v191
  %215 = vmatprep.subr.bf16.mxu0 0
  %216 = vmatpush1.bf16.xpose.msra.mxu0 %v194
  %217 = vmatprep.subr.bf16.mxu0 0
  %218 = vmatpush1.bf16.xpose.msra.mxu0 %v197
  %219 = vmatprep.subr.bf16.mxu0 0
  %220 = vmatpush1.bf16.xpose.msra.mxu0 %v200
  %221 = vmatprep.subr.bf16.mxu0 0
  %222 = vmatpush1.bf16.xpose.msra.mxu0 %v203
  %223 = vmatprep.subr.bf16.mxu0 0
  %224 = vmatpush1.bf16.xpose.msra.mxu0 %v206
  %225 = vmatprep.subr.bf16.mxu0 0
  %226 = vmatpush1.bf16.xpose.msra.mxu0 %v209
  %227 = vmatprep.subr.bf16.mxu0 0
  %228 = vmatpush1.bf16.xpose.msra.mxu0 0
  %229 = vmatprep.subr.bf16.mxu0 0
  %230 = vmatpush1.bf16.xpose.msra.mxu0 0
  %231 = vmatprep.subr.bf16.mxu0 0
  %232 = vmatpush1.bf16.xpose.msra.mxu0 0
  %233 = vmatprep.subr.bf16.mxu0 0
  %234 = vmatpush1.bf16.xpose.msra.mxu0 0
  %235 = vmatprep.subr.bf16.mxu0 0
  %236 = vmatpush1.bf16.xpose.msra.mxu0 0
  %237 = vmatprep.subr.bf16.mxu0 0
  %238 = vmatpush1.bf16.xpose.msra.mxu0 0
  %239 = vmatprep.subr.bf16.mxu0 0
  %240 = vmatpush1.bf16.xpose.msra.mxu0 0
  %241 = vmatprep.subr.bf16.mxu0 0
  %242 = vmatpush1.bf16.xpose.msra.mxu0 0
  %243 = vmatprep.mubr.bf16.mxu0 0
  %244 = vmatmul.mubr.bf16.gmra.mrb[0].mxu0 %v170
  %v245 = vpop.f32.mrb[0].mxu0
  %v246 = vadd.f32 %v81, %v245
  %v247 = vpop.f32.mrb[0].mxu0
  %v248 = vpop.f32.mrb[0].mxu0
  %v249 = vadd.f32 %v86, %v248
  %v250 = vpop.f32.mrb[0].mxu0
  %251 = vmatprep.mubr.bf16.mxu0 0
  %252 = vmatmul.mubr.bf16.gmra.mrb[0].mxu0 %v173
  %v253 = vpop.f32.mrb[0].mxu0
  %v254 = vadd.f32 %v91, %v253
  %v255 = vpop.f32.mrb[0].mxu0
  %v256 = vpop.f32.mrb[0].mxu0
  %v257 = vadd.f32 %v96, %v256
  %v258 = vpop.f32.mrb[0].mxu0
  %259 = vmatprep.mubr.bf16.mxu0 0
  %260 = vmatmul.mubr.bf16.gmra.mrb[0].mxu0 %v176
  %v261 = vpop.f32.mrb[0].mxu0
  %v262 = vadd.f32 %v101, %v261
  %v263 = vpop.f32.mrb[0].mxu0
  %v264 = vpop.f32.mrb[0].mxu0
  %v265 = vadd.f32 %v106, %v264
  %v266 = vpop.f32.mrb[0].mxu0
  %267 = vmatprep.mubr.bf16.mxu0 0
  %268 = vmatmul.mubr.bf16.gmra.mrb[0].mxu0 %v179
  %v269 = vpop.f32.mrb[0].mxu0
  %v270 = vadd.f32 %v111, %v269
  %v271 = vpop.f32.mrb[0].mxu0
  %v272 = vpop.f32.mrb[0].mxu0
  %v273 = vadd.f32 %v116, %v272
  %v274 = vpop.f32.mrb[0].mxu0
  %275 = vmatprep.mubr.bf16.mxu0 0
  %276 = vmatmul.mubr.bf16.gmra.mrb[0].mxu0 %v182
  %v277 = vpop.f32.mrb[0].mxu0
  %v278 = vadd.f32 %v121, %v277
  %v279 = vpop.f32.mrb[0].mxu0
  %v280 = vpop.f32.mrb[0].mxu0
  %v281 = vadd.f32 %v126, %v280
  %v282 = vpop.f32.mrb[0].mxu0
  %283 = vmatprep.mubr.bf16.mxu0 0
  %284 = vmatmul.mubr.bf16.gmra.mrb[0].mxu0 %v185
  %v285 = vpop.f32.mrb[0].mxu0
  %v286 = vadd.f32 %v131, %v285
  %v287 = vpop.f32.mrb[0].mxu0
  %v288 = vpop.f32.mrb[0].mxu0
  %v289 = vadd.f32 %v136, %v288
  %v290 = vpop.f32.mrb[0].mxu0
  %291 = vdwg.mxu0
  %v292 = vmax.f32 %v246, 0.0
  %v293 = vmax.f32 %v249, 0.0
  %v294 = vmax.f32 %v254, 0.0
  %v295 = vmax.f32 %v257, 0.0
  %v296 = vmax.f32 %v262, 0.0
  %v297 = vmax.f32 %v265, 0.0
  %v298 = vmax.f32 %v270, 0.0
  %v299 = vmax.f32 %v273, 0.0
  %v300 = vmax.f32 %v278, 0.0
  %v301 = vmax.f32 %v281, 0.0
  %v302 = vmax.f32 %v286, 0.0
  %v303 = vmax.f32 %v289, 0.0
  %v304 = vpack.c.bf16 %v293, %v292
  %v305 = vpack.c.bf16 %v295, %v294
  %v306 = vpack.c.bf16 %v297, %v296
  %v307 = vpack.c.bf16 %v299, %v298
  %v308 = vpack.c.bf16 %v301, %v300
  %v309 = vpack.c.bf16 %v303, %v302
  %v310 = vld [vmem:[%s2] sm:$0xf]
  %v311 = vld [vmem:[%s2 + $0x4] sm:$0xf]
  %v312 = vld [vmem:[%s2 + $0x8] sm:$0xf]
  %v313 = vld [vmem:[%s2 + $0xc] sm:$0xf]
  %v314 = vld [vmem:[%s2 + $0x10] sm:$0xf]
  %v315 = vld [vmem:[%s2 + $0x14] sm:$0xf]
  %v316 = vld [vmem:[%s2 + $0x18] sm:$0xf]
  %v317 = vld [vmem:[%s2 + $0x1c] sm:$0xf]
  %v318 = vld [vmem:[%s7 + $0x60] sm:$0xff]
  %v319 = vld [vmem:[%s7 + $0x68] sm:$0xff]
  %v320 = vld [vmem:[%s7 + $0x70] sm:$0xff]
  %v321 = vld [vmem:[%s7 + $0x78] sm:$0xff]
  %v322 = vld [vmem:[%s7 + $0x80] sm:$0xff]
  %v323 = vld [vmem:[%s7 + $0x88] sm:$0xff]
  %v324 = vld [vmem:[%s7 + $0x90] sm:$0xff]
  %v325 = vld [vmem:[%s7 + $0x98] sm:$0xff]
  %327 = vset.pattern.permute.xlu0 0
  %328 = vperm.xlu0 %327, %v318
  %v329 = vpop.permute.xlu0 %328
  %332 = vset.pattern.permute.xlu0 0
  %333 = vperm.xlu0 %332, %v319
  %v334 = vpop.permute.xlu0 %333
  %337 = vset.pattern.permute.xlu0 0
  %338 = vperm.xlu0 %337, %v320
  %v339 = vpop.permute.xlu0 %338
  %342 = vset.pattern.permute.xlu0 0
  %343 = vperm.xlu0 %342, %v321
  %v344 = vpop.permute.xlu0 %343
  %347 = vset.pattern.permute.xlu0 0
  %348 = vperm.xlu0 %347, %v322
  %v349 = vpop.permute.xlu0 %348
  %352 = vset.pattern.permute.xlu0 0
  %353 = vperm.xlu0 %352, %v323
  %v354 = vpop.permute.xlu0 %353
  %357 = vset.pattern.permute.xlu0 0
  %358 = vperm.xlu0 %357, %v324
  %v359 = vpop.permute.xlu0 %358
  %362 = vset.pattern.permute.xlu0 0
  %363 = vperm.xlu0 %362, %v325
  %v364 = vpop.permute.xlu0 %363
  %v374 = vunpack.c.l.b16 %v310
  %v375 = vunpack.c.l.b16 %v311
  %v376 = vunpack.c.l.b16 %v312
  %v377 = vunpack.c.l.b16 %v313
  %v378 = vunpack.c.l.b16 %v314
  %v379 = vunpack.c.l.b16 %v315
  %v380 = vunpack.c.l.b16 %v316
  %v381 = vunpack.c.l.b16 %v317
  %v382 = vpack.c.b16 %v375, %v374
  %v383 = vpack.c.b16 %v377, %v376
  %v384 = vpack.c.b16 %v379, %v378
  %v385 = vpack.c.b16 %v381, %v380
  %vm386 = vcmask 785408
  %v388 = vsel %vm386, %v382, 0
  %v391 = vsel %vm386, %v383, 0
  %v394 = vsel %vm386, %v384, 0
  %v397 = vsel %vm386, %v385, 0
  %399 = vmatprep.subr.bf16.mxu0 0
  %400 = vmatpush1.bf16.msra.mxu0 %v304
  %401 = vmatprep.subr.bf16.mxu0 0
  %402 = vmatpush1.bf16.msra.mxu0 %v305
  %403 = vmatprep.subr.bf16.mxu0 0
  %404 = vmatpush1.bf16.msra.mxu0 %v306
  %405 = vmatprep.subr.bf16.mxu0 0
  %406 = vmatpush1.bf16.msra.mxu0 %v307
  %407 = vmatprep.subr.bf16.mxu0 0
  %408 = vmatpush1.bf16.msra.mxu0 %v308
  %409 = vmatprep.subr.bf16.mxu0 0
  %410 = vmatpush1.bf16.msra.mxu0 %v309
  %411 = vmatprep.subr.bf16.mxu0 0
  %412 = vmatpush1.bf16.msra.mxu0 0
  %413 = vmatprep.subr.bf16.mxu0 0
  %414 = vmatpush1.bf16.msra.mxu0 0
  %415 = vmatprep.subr.bf16.mxu0 0
  %416 = vmatpush1.bf16.msra.mxu0 0
  %417 = vmatprep.subr.bf16.mxu0 0
  %418 = vmatpush1.bf16.msra.mxu0 0
  %419 = vmatprep.subr.bf16.mxu0 0
  %420 = vmatpush1.bf16.msra.mxu0 0
  %421 = vmatprep.subr.bf16.mxu0 0
  %422 = vmatpush1.bf16.msra.mxu0 0
  %423 = vmatprep.subr.bf16.mxu0 0
  %424 = vmatpush1.bf16.msra.mxu0 0
  %425 = vmatprep.subr.bf16.mxu0 0
  %426 = vmatpush1.bf16.msra.mxu0 0
  %427 = vmatprep.subr.bf16.mxu0 0
  %428 = vmatpush1.bf16.msra.mxu0 0
  %429 = vmatprep.subr.bf16.mxu0 0
  %430 = vmatpush1.bf16.msra.mxu0 0
  %431 = vmatprep.mubr.bf16.mxu0 0
  %432 = vmatmul.mubr.bf16.gmra.mrb[0].mxu0 %v388
  %v433 = vpop.f32.mrb[0].mxu0
  %v434 = vadd.f32 %v329, %v433
  %v435 = vpop.f32.mrb[0].mxu0
  %v436 = vpop.f32.mrb[0].mxu0
  %v437 = vadd.f32 %v334, %v436
  %v438 = vpop.f32.mrb[0].mxu0
  %439 = vmatprep.mubr.bf16.mxu0 0
  %440 = vmatmul.mubr.bf16.gmra.mrb[0].mxu0 %v391
  %v441 = vpop.f32.mrb[0].mxu0
  %v442 = vadd.f32 %v339, %v441
  %v443 = vpop.f32.mrb[0].mxu0
  %v444 = vpop.f32.mrb[0].mxu0
  %v445 = vadd.f32 %v344, %v444
  %v446 = vpop.f32.mrb[0].mxu0
  %447 = vmatprep.mubr.bf16.mxu0 0
  %448 = vmatmul.mubr.bf16.gmra.mrb[0].mxu0 %v394
  %v449 = vpop.f32.mrb[0].mxu0
  %v450 = vadd.f32 %v349, %v449
  %v451 = vpop.f32.mrb[0].mxu0
  %v452 = vpop.f32.mrb[0].mxu0
  %v453 = vadd.f32 %v354, %v452
  %v454 = vpop.f32.mrb[0].mxu0
  %455 = vmatprep.mubr.bf16.mxu0 0
  %456 = vmatmul.mubr.bf16.gmra.mrb[0].mxu0 %v397
  %v457 = vpop.f32.mrb[0].mxu0
  %v458 = vadd.f32 %v359, %v457
  %v459 = vpop.f32.mrb[0].mxu0
  %v460 = vpop.f32.mrb[0].mxu0
  %v461 = vadd.f32 %v364, %v460
  %v462 = vpop.f32.mrb[0].mxu0
  %463 = vdwg.mxu0
  %v464 = vmax.f32 %v434, 0.0
  %v465 = vmax.f32 %v437, 0.0
  %v466 = vmax.f32 %v442, 0.0
  %v467 = vmax.f32 %v445, 0.0
  %v468 = vmax.f32 %v450, 0.0
  %v469 = vmax.f32 %v453, 0.0
  %v470 = vmax.f32 %v458, 0.0
  %v471 = vmax.f32 %v461, 0.0
  %v472 = vpack.c.bf16 %v465, %v464
  %v473 = vpack.c.bf16 %v467, %v466
  %v474 = vpack.c.bf16 %v469, %v468
  %v475 = vpack.c.bf16 %v471, %v470
  %v476 = vld [vmem:[%s3] sm:$0xf]
  %v477 = vld [vmem:[%s3 + $0x4] sm:$0xf]
  %v478 = vld [vmem:[%s3 + $0x8] sm:$0xf]
  %v479 = vld [vmem:[%s3 + $0xc] sm:$0xf]
  %v480 = vld [vmem:[%s3 + $0x10] sm:$0xf]
  %v481 = vld [vmem:[%s3 + $0x14] sm:$0xf]
  %v482 = vld [vmem:[%s3 + $0x18] sm:$0xf]
  %v483 = vld [vmem:[%s3 + $0x1c] sm:$0xf]
  %v484 = vld [vmem:[%s7 + $0xa0] sm:$0xff]
  %v485 = vld [vmem:[%s7 + $0xa8] sm:$0xff]
  %v486 = vld [vmem:[%s7 + $0xb0] sm:$0xff]
  %v487 = vld [vmem:[%s7 + $0xb8] sm:$0xff]
  %v488 = vld [vmem:[%s7 + $0xc0] sm:$0xff]
  %v489 = vld [vmem:[%s7 + $0xc8] sm:$0xff]
  %v490 = vld [vmem:[%s7 + $0xd0] sm:$0xff]
  %v491 = vld [vmem:[%s7 + $0xd8] sm:$0xff]
  %493 = vset.pattern.permute.xlu0 0
  %494 = vperm.xlu0 %493, %v484
  %v495 = vpop.permute.xlu0 %494
  %498 = vset.pattern.permute.xlu0 0
  %499 = vperm.xlu0 %498, %v485
  %v500 = vpop.permute.xlu0 %499
  %503 = vset.pattern.permute.xlu0 0
  %504 = vperm.xlu0 %503, %v486
  %v505 = vpop.permute.xlu0 %504
  %508 = vset.pattern.permute.xlu0 0
  %509 = vperm.xlu0 %508, %v487
  %v510 = vpop.permute.xlu0 %509
  %513 = vset.pattern.permute.xlu0 0
  %514 = vperm.xlu0 %513, %v488
  %v515 = vpop.permute.xlu0 %514
  %518 = vset.pattern.permute.xlu0 0
  %519 = vperm.xlu0 %518, %v489
  %v520 = vpop.permute.xlu0 %519
  %523 = vset.pattern.permute.xlu0 0
  %524 = vperm.xlu0 %523, %v490
  %v525 = vpop.permute.xlu0 %524
  %528 = vset.pattern.permute.xlu0 0
  %529 = vperm.xlu0 %528, %v491
  %v530 = vpop.permute.xlu0 %529
  %v540 = vunpack.c.l.b16 %v476
  %v541 = vunpack.c.l.b16 %v477
  %v542 = vunpack.c.l.b16 %v478
  %v543 = vunpack.c.l.b16 %v479
  %v544 = vunpack.c.l.b16 %v480
  %v545 = vunpack.c.l.b16 %v481
  %v546 = vunpack.c.l.b16 %v482
  %v547 = vunpack.c.l.b16 %v483
  %v548 = vpack.c.b16 %v541, %v540
  %v549 = vpack.c.b16 %v543, %v542
  %v550 = vpack.c.b16 %v545, %v544
  %v551 = vpack.c.b16 %v547, %v546
  %vm552 = vcmask 523264
  %v554 = vsel %vm552, %v548, 0
  %v557 = vsel %vm552, %v549, 0
  %v560 = vsel %vm552, %v550, 0
  %v563 = vsel %vm552, %v551, 0
  %565 = vmatprep.subr.bf16.mxu0 0
  %566 = vmatpush1.bf16.msra.mxu0 %v472
  %567 = vmatprep.subr.bf16.mxu0 0
  %568 = vmatpush1.bf16.msra.mxu0 %v473
  %569 = vmatprep.subr.bf16.mxu0 0
  %570 = vmatpush1.bf16.msra.mxu0 %v474
  %571 = vmatprep.subr.bf16.mxu0 0
  %572 = vmatpush1.bf16.msra.mxu0 %v475
  %573 = vmatprep.subr.bf16.mxu0 0
  %574 = vmatpush1.bf16.msra.mxu0 0
  %575 = vmatprep.subr.bf16.mxu0 0
  %576 = vmatpush1.bf16.msra.mxu0 0
  %577 = vmatprep.subr.bf16.mxu0 0
  %578 = vmatpush1.bf16.msra.mxu0 0
  %579 = vmatprep.subr.bf16.mxu0 0
  %580 = vmatpush1.bf16.msra.mxu0 0
  %581 = vmatprep.subr.bf16.mxu0 0
  %582 = vmatpush1.bf16.msra.mxu0 0
  %583 = vmatprep.subr.bf16.mxu0 0
  %584 = vmatpush1.bf16.msra.mxu0 0
  %585 = vmatprep.subr.bf16.mxu0 0
  %586 = vmatpush1.bf16.msra.mxu0 0
  %587 = vmatprep.subr.bf16.mxu0 0
  %588 = vmatpush1.bf16.msra.mxu0 0
  %589 = vmatprep.subr.bf16.mxu0 0
  %590 = vmatpush1.bf16.msra.mxu0 0
  %591 = vmatprep.subr.bf16.mxu0 0
  %592 = vmatpush1.bf16.msra.mxu0 0
  %593 = vmatprep.subr.bf16.mxu0 0
  %594 = vmatpush1.bf16.msra.mxu0 0
  %595 = vmatprep.subr.bf16.mxu0 0
  %596 = vmatpush1.bf16.msra.mxu0 0
  %597 = vmatprep.mubr.bf16.mxu0 0
  %598 = vmatmul.mubr.bf16.gmra.mrb[0].mxu0 %v554
  %v599 = vpop.f32.mrb[0].mxu0
  %v600 = vadd.f32 %v495, %v599
  %v601 = vpop.f32.mrb[0].mxu0
  %v602 = vpop.f32.mrb[0].mxu0
  %v603 = vadd.f32 %v500, %v602
  %v604 = vpop.f32.mrb[0].mxu0
  %605 = vmatprep.mubr.bf16.mxu0 0
  %606 = vmatmul.mubr.bf16.gmra.mrb[0].mxu0 %v557
  %v607 = vpop.f32.mrb[0].mxu0
  %v608 = vadd.f32 %v505, %v607
  %v609 = vpop.f32.mrb[0].mxu0
  %v610 = vpop.f32.mrb[0].mxu0
  %v611 = vadd.f32 %v510, %v610
  %v612 = vpop.f32.mrb[0].mxu0
  %613 = vmatprep.mubr.bf16.mxu0 0
  %614 = vmatmul.mubr.bf16.gmra.mrb[0].mxu0 %v560
  %v615 = vpop.f32.mrb[0].mxu0
  %v616 = vadd.f32 %v515, %v615
  %v617 = vpop.f32.mrb[0].mxu0
  %v618 = vpop.f32.mrb[0].mxu0
  %v619 = vadd.f32 %v520, %v618
  %v620 = vpop.f32.mrb[0].mxu0
  %621 = vmatprep.mubr.bf16.mxu0 0
  %622 = vmatmul.mubr.bf16.gmra.mrb[0].mxu0 %v563
  %v623 = vpop.f32.mrb[0].mxu0
  %v624 = vadd.f32 %v525, %v623
  %v625 = vpop.f32.mrb[0].mxu0
  %v626 = vpop.f32.mrb[0].mxu0
  %v627 = vadd.f32 %v530, %v626
  %v628 = vpop.f32.mrb[0].mxu0
  %629 = vdwg.mxu0
  %v630 = vmax.f32 %v600, 0.0
  %v631 = vmax.f32 %v603, 0.0
  %v632 = vmax.f32 %v608, 0.0
  %v633 = vmax.f32 %v611, 0.0
  %v634 = vmax.f32 %v616, 0.0
  %v635 = vmax.f32 %v619, 0.0
  %v636 = vmax.f32 %v624, 0.0
  %v637 = vmax.f32 %v627, 0.0
  %v638 = vpack.c.bf16 %v631, %v630
  %v639 = vpack.c.bf16 %v633, %v632
  %v640 = vpack.c.bf16 %v635, %v634
  %v641 = vpack.c.bf16 %v637, %v636
  %v642 = vld [vmem:[%s4] sm:$0xf]
  %v643 = vld [vmem:[%s4 + $0x4] sm:$0xf]
  %v644 = vld [vmem:[%s4 + $0x8] sm:$0xf]
  %v645 = vld [vmem:[%s4 + $0xc] sm:$0xf]
  %v646 = vld [vmem:[%s7 + $0xe0] sm:$0xff]
  %v647 = vld [vmem:[%s7 + $0xe8] sm:$0xff]
  %v648 = vld [vmem:[%s7 + $0xf0] sm:$0xff]
  %v649 = vld [vmem:[%s7 + $0xf8] sm:$0xff]
  %651 = vset.pattern.permute.xlu0 0
  %652 = vperm.xlu0 %651, %v646
  %v653 = vpop.permute.xlu0 %652
  %656 = vset.pattern.permute.xlu0 0
  %657 = vperm.xlu0 %656, %v647
  %v658 = vpop.permute.xlu0 %657
  %661 = vset.pattern.permute.xlu0 0
  %662 = vperm.xlu0 %661, %v648
  %v663 = vpop.permute.xlu0 %662
  %666 = vset.pattern.permute.xlu0 0
  %667 = vperm.xlu0 %666, %v649
  %v668 = vpop.permute.xlu0 %667
  %v674 = vunpack.c.l.b16 %v642
  %v675 = vunpack.c.l.b16 %v643
  %v676 = vunpack.c.l.b16 %v644
  %v677 = vunpack.c.l.b16 %v645
  %v678 = vpack.c.b16 %v675, %v674
  %v679 = vpack.c.b16 %v677, %v676
  %v681 = vsel %vm552, %v678, 0
  %v684 = vsel %vm552, %v679, 0
  %686 = vmatprep.subr.bf16.mxu0 0
  %687 = vmatpush1.bf16.msra.mxu0 %v638
  %688 = vmatprep.subr.bf16.mxu0 0
  %689 = vmatpush1.bf16.msra.mxu0 %v639
  %690 = vmatprep.subr.bf16.mxu0 0
  %691 = vmatpush1.bf16.msra.mxu0 %v640
  %692 = vmatprep.subr.bf16.mxu0 0
  %693 = vmatpush1.bf16.msra.mxu0 %v641
  %694 = vmatprep.subr.bf16.mxu0 0
  %695 = vmatpush1.bf16.msra.mxu0 0
  %696 = vmatprep.subr.bf16.mxu0 0
  %697 = vmatpush1.bf16.msra.mxu0 0
  %698 = vmatprep.subr.bf16.mxu0 0
  %699 = vmatpush1.bf16.msra.mxu0 0
  %700 = vmatprep.subr.bf16.mxu0 0
  %701 = vmatpush1.bf16.msra.mxu0 0
  %702 = vmatprep.subr.bf16.mxu0 0
  %703 = vmatpush1.bf16.msra.mxu0 0
  %704 = vmatprep.subr.bf16.mxu0 0
  %705 = vmatpush1.bf16.msra.mxu0 0
  %706 = vmatprep.subr.bf16.mxu0 0
  %707 = vmatpush1.bf16.msra.mxu0 0
  %708 = vmatprep.subr.bf16.mxu0 0
  %709 = vmatpush1.bf16.msra.mxu0 0
  %710 = vmatprep.subr.bf16.mxu0 0
  %711 = vmatpush1.bf16.msra.mxu0 0
  %712 = vmatprep.subr.bf16.mxu0 0
  %713 = vmatpush1.bf16.msra.mxu0 0
  %714 = vmatprep.subr.bf16.mxu0 0
  %715 = vmatpush1.bf16.msra.mxu0 0
  %716 = vmatprep.subr.bf16.mxu0 0
  %717 = vmatpush1.bf16.msra.mxu0 0
  %718 = vmatprep.mubr.bf16.mxu0 0
  %719 = vmatmul.mubr.bf16.gmra.mrb[0].mxu0 %v681
  %v720 = vpop.f32.mrb[0].mxu0
  %v721 = vadd.f32 %v653, %v720
  %v722 = vpop.f32.mrb[0].mxu0
  %v723 = vpop.f32.mrb[0].mxu0
  %v724 = vadd.f32 %v658, %v723
  %v725 = vpop.f32.mrb[0].mxu0
  %726 = vmatprep.mubr.bf16.mxu0 0
  %727 = vmatmul.mubr.bf16.gmra.mrb[0].mxu0 %v684
  %v728 = vpop.f32.mrb[0].mxu0
  %v729 = vadd.f32 %v663, %v728
  %v730 = vpop.f32.mrb[0].mxu0
  %v731 = vpop.f32.mrb[0].mxu0
  %v732 = vadd.f32 %v668, %v731
  %v733 = vpop.f32.mrb[0].mxu0
  %734 = vdwg.mxu0
  %v735 = vmax.f32 %v721, 0.0
  %v736 = vmax.f32 %v724, 0.0
  %v737 = vmax.f32 %v729, 0.0
  %v738 = vmax.f32 %v732, 0.0
  %v739 = vpack.c.bf16 %v736, %v735
  %v740 = vpack.c.bf16 %v738, %v737
  %v741 = vld [vmem:[%s5] sm:$0xf]
  %v742 = vld [vmem:[%s5 + $0x4] sm:$0xf]
  %v743 = vld [vmem:[%s7 + $0x100] sm:$0xff]
  %v744 = vld [vmem:[%s7 + $0x108] sm:$0xff]
  %746 = vset.pattern.permute.xlu0 0
  %747 = vperm.xlu0 %746, %v743
  %v748 = vpop.permute.xlu0 %747
  %751 = vset.pattern.permute.xlu0 0
  %752 = vperm.xlu0 %751, %v744
  %v753 = vpop.permute.xlu0 %752
  %v757 = vunpack.c.l.b16 %v741
  %v758 = vunpack.c.l.b16 %v742
  %v759 = vpack.c.b16 %v758, %v757
  %v761 = vsel %vm168, %v759, 0
  %763 = vmatprep.subr.bf16.mxu0 0
  %764 = vmatpush1.bf16.msra.mxu0 %v739
  %765 = vmatprep.subr.bf16.mxu0 0
  %766 = vmatpush1.bf16.msra.mxu0 %v740
  %767 = vmatprep.subr.bf16.mxu0 0
  %768 = vmatpush1.bf16.msra.mxu0 0
  %769 = vmatprep.subr.bf16.mxu0 0
  %770 = vmatpush1.bf16.msra.mxu0 0
  %771 = vmatprep.subr.bf16.mxu0 0
  %772 = vmatpush1.bf16.msra.mxu0 0
  %773 = vmatprep.subr.bf16.mxu0 0
  %774 = vmatpush1.bf16.msra.mxu0 0
  %775 = vmatprep.subr.bf16.mxu0 0
  %776 = vmatpush1.bf16.msra.mxu0 0
  %777 = vmatprep.subr.bf16.mxu0 0
  %778 = vmatpush1.bf16.msra.mxu0 0
  %779 = vmatprep.subr.bf16.mxu0 0
  %780 = vmatpush1.bf16.msra.mxu0 0
  %781 = vmatprep.subr.bf16.mxu0 0
  %782 = vmatpush1.bf16.msra.mxu0 0
  %783 = vmatprep.subr.bf16.mxu0 0
  %784 = vmatpush1.bf16.msra.mxu0 0
  %785 = vmatprep.subr.bf16.mxu0 0
  %786 = vmatpush1.bf16.msra.mxu0 0
  %787 = vmatprep.subr.bf16.mxu0 0
  %788 = vmatpush1.bf16.msra.mxu0 0
  %789 = vmatprep.subr.bf16.mxu0 0
  %790 = vmatpush1.bf16.msra.mxu0 0
  %791 = vmatprep.subr.bf16.mxu0 0
  %792 = vmatpush1.bf16.msra.mxu0 0
  %793 = vmatprep.subr.bf16.mxu0 0
  %794 = vmatpush1.bf16.msra.mxu0 0
  %795 = vmatprep.mubr.bf16.mxu0 0
  %796 = vmatmul.mubr.bf16.gmra.mrb[0].mxu0 %v761
  %v797 = vpop.f32.mrb[0].mxu0
  %v798 = vadd.f32 %v748, %v797
  %v799 = vpop.f32.mrb[0].mxu0
  %v800 = vpop.f32.mrb[0].mxu0
  %v801 = vadd.f32 %v753, %v800
  %v802 = vpop.f32.mrb[0].mxu0
  %803 = vdwg.mxu0
  %v804 = vmax.f32 %v798, 0.0
  %v805 = vmax.f32 %v801, 0.0
  %v806 = vpack.c.bf16 %v805, %v804
  %v807 = vld [vmem:[%s6] sm:$0xf]
  %v808 = vld [vmem:[%s7 + $0x110] sm:$0xff]
  %810 = vset.pattern.permute.xlu0 0
  %811 = vperm.xlu0 %810, %v808
  %v812 = vpop.permute.xlu0 %811
  %vm814 = vcmask 130048
  %v816 = vsel %vm814, %v807, 0
  %818 = vmatprep.subr.bf16.mxu0 0
  %819 = vmatpush1.bf16.msra.mxu0 %v806
  %820 = vmatprep.subr.bf16.mxu0 0
  %821 = vmatpush1.bf16.msra.mxu0 0
  %822 = vmatprep.subr.bf16.mxu0 0
  %823 = vmatpush1.bf16.msra.mxu0 0
  %824 = vmatprep.subr.bf16.mxu0 0
  %825 = vmatpush1.bf16.msra.mxu0 0
  %826 = vmatprep.subr.bf16.mxu0 0
  %827 = vmatpush1.bf16.msra.mxu0 0
  %828 = vmatprep.subr.bf16.mxu0 0
  %829 = vmatpush1.bf16.msra.mxu0 0
  %830 = vmatprep.subr.bf16.mxu0 0
  %831 = vmatpush1.bf16.msra.mxu0 0
  %832 = vmatprep.subr.bf16.mxu0 0
  %833 = vmatpush1.bf16.msra.mxu0 0
  %834 = vmatprep.subr.bf16.mxu0 0
  %835 = vmatpush1.bf16.msra.mxu0 0
  %836 = vmatprep.subr.bf16.mxu0 0
  %837 = vmatpush1.bf16.msra.mxu0 0
  %838 = vmatprep.subr.bf16.mxu0 0
  %839 = vmatpush1.bf16.msra.mxu0 0
  %840 = vmatprep.subr.bf16.mxu0 0
  %841 = vmatpush1.bf16.msra.mxu0 0
  %842 = vmatprep.subr.bf16.mxu0 0
  %843 = vmatpush1.bf16.msra.mxu0 0
  %844 = vmatprep.subr.bf16.mxu0 0
  %845 = vmatpush1.bf16.msra.mxu0 0
  %846 = vmatprep.subr.bf16.mxu0 0
  %847 = vmatpush1.bf16.msra.mxu0 0
  %848 = vmatprep.subr.bf16.mxu0 0
  %849 = vmatpush1.bf16.msra.mxu0 0
  %850 = vmatprep.mubr.bf16.mxu0 0
  %851 = vmatmul.mubr.bf16.gmra.mrb[0].mxu0 %v816
  %v852 = vpop.f32.mrb[0].mxu0
  %v853 = vadd.f32 %v812, %v852
  %v854 = vpop.f32.mrb[0].mxu0
  %v855 = vpop.f32.mrb[0].mxu0
  %v856 = vpop.f32.mrb[0].mxu0
  %857 = vdwg.mxu0
  %858 = vst [vmem:[%s8] sm:$0xff] %v853
  // Predicated region
  $region34: #{_forward_impl.1} parent=0 // pred_check
    _
  $region35: #{_forward_impl.1} parent=0 // pred_check_branch
    %860 = sbr.rel (0) target = $region37
  $region36: #{_forward_impl.1} parent=0 // pred_region
    _
  $region37: #{_forward_impl.1} parent=0 // pred_fallthru
    _
  // Predicated region
  $region38: #{_forward_impl.1} parent=0 // pred_check
    _
  $region39: #{_forward_impl.1} parent=0 // pred_check_branch
    %862 = sbr.rel (0) target = $region41
  $region40: #{_forward_impl.1} parent=0 // pred_region
    _
  $region41: #{_forward_impl.1} parent=0 // pred_fallthru
    _

</llo_original>
